<compile_context>
chip_gen: v7x
topology: tpu7x:2x2x1
jax: 0.10.0
libtpu: 0.0.40
codegen_flags: <defaults>
</compile_context>

<pallas_src>
import jax
import jax.numpy as jnp
from jax.experimental import pallas as pl
from jax.experimental.pallas import tpu as pltpu


# ---------------------------------------------------------------------------
# Init-time glue (mirrors get_outlier / set_zero / BinaryDiff.__init__)
# ---------------------------------------------------------------------------
def get_outlier(tensor, percent=0.5):
    num_elements = tensor.size
    num_to_keep = int(num_elements * percent / 100)
    flat = tensor.reshape(-1)
    result = jnp.zeros_like(flat)
    if num_to_keep > 0:
        _, top_idx = jax.lax.top_k(flat, num_to_keep)
        _, bot_idx = jax.lax.top_k(-flat, num_to_keep)
        result = result.at[top_idx].set(flat[top_idx])
        result = result.at[bot_idx].set(flat[bot_idx])
    return result.reshape(tensor.shape)


def set_zero(A, B):
    return jnp.where(B != 0, jnp.zeros_like(A), A)


def binary_diff_init(base, finetune):
    """base, finetune: [N_out, K_in] (PyTorch Linear weight convention).

    Returns:
      base_t  : [K, N] bf16  (== base.T, bf16 MXU operand)
      signc_t : [K, N] bf16  (== coeff * sign(diff).T, coeff folded at init)
      outlier : [N, K] f32   (buffer kept for parity; unused in forward,
                              exactly like the reference module)
      coeff   : scalar f32
    """
    diff = finetune - base
    outlier = get_outlier(diff, percent=0.02)
    diff = set_zero(diff, outlier)
    coeff = jnp.mean(jnp.abs(diff.astype(jnp.float32)))
    # mask = 1 where diff >= 0 else 0  ->  sign = 2*mask - 1 in {+1, -1};
    # fold coeff in right away so in-kernel weight prep is a single bf16 add.
    # TODO(synk): coeff is a trainable nn.Parameter in the reference; folding
    # it here is exact for inference, but a training path would keep coeff
    # separate (2-op weight prep) or re-fold after each optimizer step.
    # TODO(synk): diff == 0 (incl. zeroed outliers) maps to +1 like the
    # reference BitDelta unpack; the 'outlier' buffer is unused in forward.
    sign = jnp.where(diff < 0, -1.0, 1.0).astype(jnp.float32)
    signc_t = (coeff * sign).T.astype(jnp.bfloat16)
    base_t = base.T.astype(jnp.bfloat16)
    return base_t, signc_t, outlier, coeff


# ---------------------------------------------------------------------------
# Pallas kernels
# ---------------------------------------------------------------------------
def _make_kernel(fused, direct):
    """fused : weight tile is built as base_tile + signc_tile (one bf16 add).
       direct: accumulate straight into the (f32, k-resident) output block."""

    def kernel(*refs):
        if direct:
            x_ref, *w_refs, o_ref = refs
            acc_ref = o_ref
        else:
            *io_refs, acc_ref = refs
            x_ref, *w_refs, o_ref = io_refs

        @pl.when(pl.program_id(2) == 0)
        def _init():
            acc_ref[...] = jnp.zeros_like(acc_ref)

        w = w_refs[0][...]
        if fused:
            w = w + w_refs[1][...]          # single bf16 VPU add per element
        acc_ref[...] += jnp.dot(x_ref[...], w,
                                preferred_element_type=jnp.float32)

        if not direct:
            @pl.when(pl.program_id(2) == pl.num_programs(2) - 1)
            def _fin():
                o_ref[...] = acc_ref[...].astype(o_ref.dtype)

    return kernel


# ---------------------------------------------------------------------------
# Wrapper
# ---------------------------------------------------------------------------
def _vmem_cap_bytes():
    """Generation-aware cap: ~70% of physical VMEM, conservative fallback."""
    try:
        phys = getattr(pltpu.get_tpu_info(), "vmem_capacity_bytes", None)
        if phys:
            return int(phys * 0.7)
    except Exception:
        pass
    return 44 << 20            # ~70% of v7x's 64 MiB (smallest current part)


def _is_megacore_part():
    """Best-effort detection; only 2-TensorCore parts benefit from N-split."""
    try:
        kind = jax.devices()[0].device_kind.lower()
    except Exception:
        return False
    return any(tag in kind for tag in ("v4", "v5p", "7x"))


def binary_diff_forward(x, base_t, signc_t, *, tm=None, tn=None, tk=None):
    """x: [B, S, K]; base_t, signc_t: [K, N] bf16. Returns [B, S, N] (x.dtype)."""
    B, S, K = x.shape
    Kw, N = base_t.shape
    assert K == Kw and signc_t.shape == (K, N)
    M = B * S
    out_dtype = x.dtype

    # bf16 MXU operands, f32 accumulation.
    x2d = x.reshape(M, K).astype(jnp.bfloat16)
    base_t = base_t.astype(jnp.bfloat16)
    signc_t = signc_t.astype(jnp.bfloat16)

    vmem_cap = _vmem_cap_bytes()
    big_vmem = vmem_cap >= (80 << 20)           # v5e / v6e class (128 MiB)
    if tm is None:
        tm = 512
    if tn is None:
        tn = 1024 if big_vmem else 512
    if tk is None:
        tk = 1024 if big_vmem else 512

    tm = min(tm, M)
    tn = min(tn, N)
    tk = min(tk, K)

    # Megacore (2-TC) parts only: if everything collapsed to one (i, j) tile,
    # split N so both cores get work (kept a multiple of 128 for dense vst).
    if _is_megacore_part() and pl.cdiv(M, tm) * pl.cdiv(N, tn) < 2 and tn % 256 == 0:
        tn //= 2

    # Ragged K is a correctness hazard (OOB k-blocks accumulate garbage into
    # in-bounds outputs): zero-pad K to a tile multiple. Ragged M/N are safe.
    if K % tk != 0:
        Kp = pl.cdiv(K, tk) * tk
        x2d = jnp.pad(x2d, ((0, 0), (0, Kp - K)))
        base_t = jnp.pad(base_t, ((0, Kp - K), (0, 0)))
        signc_t = jnp.pad(signc_t, ((0, Kp - K), (0, 0)))
        K = Kp

    gm, gn, gk = pl.cdiv(M, tm), pl.cdiv(N, tn), pl.cdiv(K, tk)
    direct = jnp.dtype(out_dtype) == jnp.dtype(jnp.float32)
    fused = gm < 4                 # large M: pre-materialize w once instead

    if fused:
        weight_args = (base_t, signc_t)
    else:
        # One-time K x N bf16 elementwise pass; amortized over >= 4 row blocks.
        weight_args = ((base_t + signc_t).astype(jnp.bfloat16),)

    # Decode-sized M streaming many weight tiles: triple-buffer the weights.
    deep_buffer = (gm == 1) and (gn * gk >= 3)

    def w_spec():
        if deep_buffer:
            return pl.BlockSpec((tk, tn), lambda i, j, k: (k, j),
                                pipeline_mode=pl.Buffered(3))
        return pl.BlockSpec((tk, tn), lambda i, j, k: (k, j))

    in_specs = [pl.BlockSpec((tm, tk), lambda i, j, k: (i, k))]
    in_specs += [w_spec() for _ in weight_args]

    scratch_shapes = () if direct else (pltpu.VMEM((tm, tn), jnp.float32),)

    # VMEM budget: pipelined input/weight/output tiles (+ acc), 2x headroom,
    # floored at 16 MiB, capped by the generation-aware limit.
    n_wbuf = 3 if deep_buffer else 2
    est = (2 * tm * tk * 2                                     # x tiles (bf16)
           + n_wbuf * tk * tn * 2 * len(weight_args)           # weight tiles
           + 2 * tm * tn * jnp.dtype(out_dtype).itemsize       # output tiles
           + (0 if direct else tm * tn * 4))                   # acc scratch
    vmem_limit = int(min(max(2 * est, 16 << 20), vmem_cap))

    out = pl.pallas_call(
        _make_kernel(fused, direct),
        out_shape=jax.ShapeDtypeStruct((M, N), out_dtype),
        grid_spec=pltpu.PrefetchScalarGridSpec(
            num_scalar_prefetch=0,
            grid=(gm, gn, gk),
            in_specs=in_specs,
            out_specs=pl.BlockSpec((tm, tn), lambda i, j, k: (i, j)),
            scratch_shapes=scratch_shapes),
        compiler_params=pltpu.CompilerParams(
            dimension_semantics=("parallel", "parallel", "arbitrary"),
            vmem_limit_bytes=vmem_limit),
    )(x2d, *weight_args)
    return out.reshape(B, S, N)


# ---------------------------------------------------------------------------
if __name__ == "__main__":
    key = jax.random.PRNGKey(0)
    k1, k2, k3 = jax.random.split(key, 3)

    N_out, K_in = 256, 128      # out_features, in_features (hidden)
    B, S = 2, 8                 # batch, seq

    base = jax.random.normal(k1, (N_out, K_in), jnp.float32) * 0.02
    finetune = base + jax.random.normal(k2, (N_out, K_in), jnp.float32) * 0.01
    x = jax.random.normal(k3, (B, S, K_in), jnp.float32)

    base_t, signc_t, outlier, coeff = binary_diff_init(base, finetune)

    y = binary_diff_forward(x, base_t, signc_t)
    y = jax.block_until_ready(y)
    assert y.shape == (B, S, N_out)

    # Tight check: same bf16-rounded operands / fused weight as the kernel.
    ref_bf16 = jnp.einsum('bsk,kn->bsn', x.astype(jnp.bfloat16),
                          base_t + signc_t,
                          preferred_element_type=jnp.float32)
    assert bool(jnp.allclose(y, ref_bf16, atol=2e-3, rtol=2e-3))

    # Loose check: exact-f32 BinaryDiff math (slack for bf16 operand rounding).
    diff = set_zero(finetune - base, get_outlier(finetune - base, percent=0.02))
    sign = jnp.where(diff < 0, -1.0, 1.0)
    ref_f32 = (jnp.einsum('bsk,nk->bsn', x, base)
               + coeff * jnp.einsum('bsk,nk->bsn', x, sign))
    assert bool(jnp.allclose(y, ref_f32, atol=5e-2, rtol=5e-2))

    print("KERNEL_OK")
</pallas_src>

<mosaic_0001>
module attributes {stable_mosaic.version = 11 : i64} {
  func.func @kernel(%arg0: i32, %arg1: i32, %arg2: i32, %arg3: memref<16x128xbf16, #tpu.memory_space<vmem>>, %arg4: memref<128x256xbf16, #tpu.memory_space<vmem>>, %arg5: memref<128x256xbf16, #tpu.memory_space<vmem>>, %arg6: memref<16x256xf32, #tpu.memory_space<vmem>>) attributes {dimension_semantics = [#tpu.dimension_semantics<parallel>, #tpu.dimension_semantics<parallel>, #tpu.dimension_semantics<arbitrary>], iteration_bounds = array<i64: 1, 1, 1>, scalar_prefetch = 0 : i64, scratch_operands = 0 : i64, tpu.core_type = #tpu.core_type<tc>, window_params = [{transform_indices = @transform_0, window_bounds = array<i64: 16, 128>}, {transform_indices = @transform_1, window_bounds = array<i64: 128, 256>}, {transform_indices = @transform_2, window_bounds = array<i64: 128, 256>}, {transform_indices = @transform_3, window_bounds = array<i64: 16, 256>}]} {
    %c0_i32 = arith.constant 0 : i32
    %0 = arith.cmpi eq, %arg2, %c0_i32 : i32
    %1 = arith.extui %0 : i1 to i32
    %c0_i32_0 = arith.constant 0 : i32
    %2 = arith.cmpi ne, %1, %c0_i32_0 : i32
    scf.if %2 {
      %cst_10 = arith.constant 0.000000e+00 : f32
      %11 = vector.broadcast %cst_10 : f32 to vector<16x256xf32>
      %c0_11 = arith.constant 0 : index
      %c0_12 = arith.constant 0 : index
      %12 = vector.load %arg6[%c0_11, %c0_12] : memref<16x256xf32, #tpu.memory_space<vmem>>, vector<16x256xf32>
      tpu.vector_store %arg6[%c0_11, %c0_12], %11 {strides = array<i32>} : memref<16x256xf32, #tpu.memory_space<vmem>>, vector<16x256xf32>,
    } else {
    }
    %c0 = arith.constant 0 : index
    %c0_1 = arith.constant 0 : index
    %3 = vector.load %arg4[%c0, %c0_1] : memref<128x256xbf16, #tpu.memory_space<vmem>>, vector<128x256xbf16>
    %c0_2 = arith.constant 0 : index
    %c0_3 = arith.constant 0 : index
    %4 = vector.load %arg5[%c0_2, %c0_3] : memref<128x256xbf16, #tpu.memory_space<vmem>>, vector<128x256xbf16>
    %5 = arith.addf %3, %4 : vector<128x256xbf16>
    %c0_4 = arith.constant 0 : index
    %c0_5 = arith.constant 0 : index
    %6 = vector.load %arg6[%c0_4, %c0_5] : memref<16x256xf32, #tpu.memory_space<vmem>>, vector<16x256xf32>
    %c0_6 = arith.constant 0 : index
    %c0_7 = arith.constant 0 : index
    %7 = vector.load %arg3[%c0_6, %c0_7] : memref<16x128xbf16, #tpu.memory_space<vmem>>, vector<16x128xbf16>
    %cst = arith.constant dense<0.000000e+00> : vector<16x256xf32>
    %8 = tpu.matmul %7, %5, %cst {dimension_numbers = #tpu.dot_dimension_numbers<[1], [0], [0], [1], [0, 0, 1, 1], [], []>} : vector<16x128xbf16>, vector<128x256xbf16>, vector<16x256xf32> -> vector<16x256xf32>
    %9 = arith.addf %6, %8 : vector<16x256xf32>
    %c0_8 = arith.constant 0 : index
    %c0_9 = arith.constant 0 : index
    %10 = vector.load %arg6[%c0_8, %c0_9] : memref<16x256xf32, #tpu.memory_space<vmem>>, vector<16x256xf32>
    tpu.vector_store %arg6[%c0_8, %c0_9], %9 {strides = array<i32>} : memref<16x256xf32, #tpu.memory_space<vmem>>, vector<16x256xf32>,
    return
  }
  func.func @transform_0(%arg0: i32, %arg1: i32, %arg2: i32) -> (i32, i32) {
    %c0_i32 = arith.constant 0 : i32
    return %arg0, %arg2 : i32, i32
  }
  func.func @transform_1(%arg0: i32, %arg1: i32, %arg2: i32) -> (i32, i32) {
    %c0_i32 = arith.constant 0 : i32
    return %arg2, %arg1 : i32, i32
  }
  func.func @transform_2(%arg0: i32, %arg1: i32, %arg2: i32) -> (i32, i32) {
    %c0_i32 = arith.constant 0 : i32
    return %arg2, %arg1 : i32, i32
  }
  func.func @transform_3(%arg0: i32, %arg1: i32, %arg2: i32) -> (i32, i32) {
    %c0_i32 = arith.constant 0 : i32
    return %arg0, %arg1 : i32, i32
  }
}

</mosaic_0001>

<llo_original>
// kernel: tpu_custom_call.1
$region0: #{tpu_custom_call.1}
  #allocation0 [shape = 'u32[]', space=smem, size = 0x4, offset = 0x4, fixed_abs, tag = 'smem constant byte address 0x4 - core index']
  #allocation1 [shape = 'u32[144,128]{1,0:T(1,128)}', space=vmem, size = 0x12000, scoped, tag = 'internal scratch']
  %s0 = inlined_call_operand.hbm [shape: bf16[16,128], index: 0, kind: input, shape index: {}]
  %s1 = inlined_call_operand.hbm [shape: bf16[128,256], index: 1, kind: input, shape index: {}]
  %s2 = inlined_call_operand.hbm [shape: bf16[128,256], index: 2, kind: input, shape index: {}]
  %s3 = inlined_call_operand.hbm [shape: f32[16,256], index: 3, kind: output, shape index: {}]
  %s4 = sld [smem:[#allocation0]]
  $region38: #{tpu_custom_call.1} parent=0
    _
  %s6 = ssub.s32 1, %s4
  %s7 = scalar_select 0, %s6, %s4
  $region1: #{tpu_custom_call.1} parent=0
    #allocation2 [shape = 'u8[4096]{0}', space=vmem, size = 0x1000, scoped, tag = 'input window, operand 0, single buffered']
    #allocation3 [shape = 's32[1]{0}', space=sflag, size = 0x4, scoped, tag = 'scoped memory for tpu_custom_call.1']
    #allocation4 [shape = 's32[1]{0}', space=sflag, size = 0x4, scoped, tag = 'scoped memory for tpu_custom_call.1']
    #allocation5 [shape = 'u8[65536]{0}', space=vmem, size = 0x10000, scoped, tag = 'input window, operand 1, single buffered']
    #allocation6 [shape = 's32[1]{0}', space=sflag, size = 0x4, scoped, tag = 'scoped memory for tpu_custom_call.1']
    #allocation7 [shape = 'u8[65536]{0}', space=vmem, size = 0x10000, scoped, tag = 'input window, operand 2, single buffered']
    #allocation8 [shape = 'u8[16384]{0}', space=vmem, size = 0x4000, scoped, tag = 'output window, operand 0, single buffered']
    %8 = vsyncpa [#allocation3], 0
    %9 = vsyncpa [#allocation6], 0
    %10 = vsyncpa [#allocation4], 0
    // Predicated region
    $region2: #{tpu_custom_call.1} parent=1 // pred_check
      _
    $region3: #{tpu_custom_call.1} parent=1 // pred_check_branch
      %12 = sbr.rel (0) target = $region5
    $region4: #{tpu_custom_call.1} parent=1 // pred_region
      %s14 = ssub.s32 128, 128
      %15 = vsyncadd [#allocation3], %s14
      %s16 = sshll.u32 [#allocation2], 4
      %s17 = int_to_ptr.vmem [resolvable:$true] %s16
      %22 = dma.hbm_to_vmem [thread:$0]  %s0, 128, %s17, [#allocation3], 64, 64, 4
    $region5: #{tpu_custom_call.1} parent=1 // pred_fallthru
      _
    // Predicated region
    $region6: #{tpu_custom_call.1} parent=1 // pred_check
      _
    $region7: #{tpu_custom_call.1} parent=1 // pred_check_branch
      %24 = sbr.rel (0) target = $region9
    $region8: #{tpu_custom_call.1} parent=1 // pred_region
      %s26 = ssub.s32 2048, 2048
      %27 = vsyncadd [#allocation6], %s26
      %s28 = sshll.u32 [#allocation5], 4
      %s29 = int_to_ptr.vmem [resolvable:$true] %s28
      %34 = dma.hbm_to_vmem [thread:$0]  %s1, 2048, %s29, [#allocation6], 128, 128, 8
    $region9: #{tpu_custom_call.1} parent=1 // pred_fallthru
      _
    // Predicated region
    $region10: #{tpu_custom_call.1} parent=1 // pred_check
      _
    $region11: #{tpu_custom_call.1} parent=1 // pred_check_branch
      %36 = sbr.rel (0) target = $region13
    $region12: #{tpu_custom_call.1} parent=1 // pred_region
      %s38 = ssub.s32 2048, 2048
      %39 = vsyncadd [#allocation6], %s38
      %s40 = sshll.u32 [#allocation7], 4
      %s41 = int_to_ptr.vmem [resolvable:$true] %s40
      %46 = dma.hbm_to_vmem [thread:$0]  %s2, 2048, %s41, [#allocation6], 128, 128, 8
    $region13: #{tpu_custom_call.1} parent=1 // pred_fallthru
      _
    // Predicated region
    $region14: #{tpu_custom_call.1} parent=1 // pred_check
      _
    $region15: #{tpu_custom_call.1} parent=1 // pred_check_branch
      %48 = sbr.rel (0) target = $region17
    $region16: #{tpu_custom_call.1} parent=1 // pred_region
      %49 = dma.done [#allocation3], 128
    $region17: #{tpu_custom_call.1} parent=1 // pred_fallthru
      _
    // Predicated region
    $region18: #{tpu_custom_call.1} parent=1 // pred_check
      _
    $region19: #{tpu_custom_call.1} parent=1 // pred_check_branch
      %51 = sbr.rel (0) target = $region21
    $region20: #{tpu_custom_call.1} parent=1 // pred_region
      %52 = dma.done [#allocation6], 2048
    $region21: #{tpu_custom_call.1} parent=1 // pred_fallthru
      _
    // Predicated region
    $region22: #{tpu_custom_call.1} parent=1 // pred_check
      _
    $region23: #{tpu_custom_call.1} parent=1 // pred_check_branch
      %54 = sbr.rel (0) target = $region25
    $region24: #{tpu_custom_call.1} parent=1 // pred_region
      %55 = dma.done [#allocation6], 2048
    $region25: #{tpu_custom_call.1} parent=1 // pred_fallthru
      _
    %p57 = scmp.eq.s32.totalorder 0, 0
    // Predicated region
    $region26: #{tpu_custom_call.1} parent=1 // pred_check
      %p58 = pneg %p57
    $region27: #{tpu_custom_call.1} parent=1 // pred_check_branch
      %60 = sbr.rel (%p58) target = $region29
    $region28: #{tpu_custom_call.1} parent=1 // pred_region
      %61 = vst [vmem:[#allocation8] sm:$0xff] 0.0
      %62 = vst [vmem:[#allocation8 + $0x8] sm:$0xff] 0.0
      %63 = vst [vmem:[#allocation8 + $0x10] sm:$0xff] 0.0
      %64 = vst [vmem:[#allocation8 + $0x18] sm:$0xff] 0.0
    $region29: #{tpu_custom_call.1} parent=1 // pred_fallthru
      _
    %v65 = vld [vmem:[#allocation5] sm:$0xff]
    %v66 = vld [vmem:[#allocation5 + $0x8] sm:$0xff]
    %v67 = vld [vmem:[#allocation5 + $0x10] sm:$0xff]
    %v68 = vld [vmem:[#allocation5 + $0x18] sm:$0xff]
    %v69 = vld [vmem:[#allocation5 + $0x20] sm:$0xff]
    %v70 = vld [vmem:[#allocation5 + $0x28] sm:$0xff]
    %v71 = vld [vmem:[#allocation5 + $0x30] sm:$0xff]
    %v72 = vld [vmem:[#allocation5 + $0x38] sm:$0xff]
    %v73 = vld [vmem:[#allocation5 + $0x40] sm:$0xff]
    %v74 = vld [vmem:[#allocation5 + $0x48] sm:$0xff]
    %v75 = vld [vmem:[#allocation5 + $0x50] sm:$0xff]
    %v76 = vld [vmem:[#allocation5 + $0x58] sm:$0xff]
    %v77 = vld [vmem:[#allocation5 + $0x60] sm:$0xff]
    %v78 = vld [vmem:[#allocation5 + $0x68] sm:$0xff]
    %v79 = vld [vmem:[#allocation5 + $0x70] sm:$0xff]
    %v80 = vld [vmem:[#allocation5 + $0x78] sm:$0xff]
    %v81 = vld [vmem:[#allocation7] sm:$0xff]
    %v82 = vld [vmem:[#allocation7 + $0x8] sm:$0xff]
    %v83 = vld [vmem:[#allocation7 + $0x10] sm:$0xff]
    %v84 = vld [vmem:[#allocation7 + $0x18] sm:$0xff]
    %v85 = vld [vmem:[#allocation7 + $0x20] sm:$0xff]
    %v86 = vld [vmem:[#allocation7 + $0x28] sm:$0xff]
    %v87 = vld [vmem:[#allocation7 + $0x30] sm:$0xff]
    %v88 = vld [vmem:[#allocation7 + $0x38] sm:$0xff]
    %v89 = vld [vmem:[#allocation7 + $0x40] sm:$0xff]
    %v90 = vld [vmem:[#allocation7 + $0x48] sm:$0xff]
    %v91 = vld [vmem:[#allocation7 + $0x50] sm:$0xff]
    %v92 = vld [vmem:[#allocation7 + $0x58] sm:$0xff]
    %v93 = vld [vmem:[#allocation7 + $0x60] sm:$0xff]
    %v94 = vld [vmem:[#allocation7 + $0x68] sm:$0xff]
    %v95 = vld [vmem:[#allocation7 + $0x70] sm:$0xff]
    %v96 = vld [vmem:[#allocation7 + $0x78] sm:$0xff]
    %v97 = vadd.bf16 %v65, %v81
    %v98 = vadd.bf16 %v66, %v82
    %v99 = vadd.bf16 %v67, %v83
    %v100 = vadd.bf16 %v68, %v84
    %v101 = vadd.bf16 %v69, %v85
    %v102 = vadd.bf16 %v70, %v86
    %v103 = vadd.bf16 %v71, %v87
    %v104 = vadd.bf16 %v72, %v88
    %v105 = vadd.bf16 %v73, %v89
    %v106 = vadd.bf16 %v74, %v90
    %v107 = vadd.bf16 %v75, %v91
    %v108 = vadd.bf16 %v76, %v92
    %v109 = vadd.bf16 %v77, %v93
    %v110 = vadd.bf16 %v78, %v94
    %v111 = vadd.bf16 %v79, %v95
    %v112 = vadd.bf16 %v80, %v96
    %v113 = vld [vmem:[#allocation8] sm:$0xff]
    %v114 = vld [vmem:[#allocation8 + $0x8] sm:$0xff]
    %v115 = vld [vmem:[#allocation8 + $0x10] sm:$0xff]
    %v116 = vld [vmem:[#allocation8 + $0x18] sm:$0xff]
    %v117 = vld [vmem:[#allocation2] sm:$0xf]
    %v118 = vld [vmem:[#allocation2 + $0x4] sm:$0xf]
    %v121 = vunpack.c.l.b16 %v117
    %v122 = vunpack.c.l.b16 %v118
    %v123 = vpack.c.b16 %v122, %v121
    %v141 = vunpack.c.l.b16 %v97
    %v142 = vunpack.c.h.b16 %v97
    %v143 = vunpack.c.l.b16 %v98
    %v144 = vunpack.c.h.b16 %v98
    %v145 = vunpack.c.l.b16 %v99
    %v146 = vunpack.c.h.b16 %v99
    %v147 = vunpack.c.l.b16 %v100
    %v148 = vunpack.c.h.b16 %v100
    %v149 = vunpack.c.l.b16 %v101
    %v150 = vunpack.c.h.b16 %v101
    %v151 = vunpack.c.l.b16 %v102
    %v152 = vunpack.c.h.b16 %v102
    %v153 = vunpack.c.l.b16 %v103
    %v154 = vunpack.c.h.b16 %v103
    %v155 = vunpack.c.l.b16 %v104
    %v156 = vunpack.c.h.b16 %v104
    %v157 = vunpack.c.l.b16 %v105
    %v158 = vunpack.c.h.b16 %v105
    %v159 = vunpack.c.l.b16 %v106
    %v160 = vunpack.c.h.b16 %v106
    %v161 = vunpack.c.l.b16 %v107
    %v162 = vunpack.c.h.b16 %v107
    %v163 = vunpack.c.l.b16 %v108
    %v164 = vunpack.c.h.b16 %v108
    %v165 = vunpack.c.l.b16 %v109
    %v166 = vunpack.c.h.b16 %v109
    %v167 = vunpack.c.l.b16 %v110
    %v168 = vunpack.c.h.b16 %v110
    %v169 = vunpack.c.l.b16 %v111
    %v170 = vunpack.c.h.b16 %v111
    %v171 = vunpack.c.l.b16 %v112
    %v172 = vunpack.c.h.b16 %v112
    %v173 = vpack.c.b16 %v143, %v141
    %v174 = vpack.c.b16 %v144, %v142
    %v175 = vpack.c.b16 %v147, %v145
    %v176 = vpack.c.b16 %v148, %v146
    %v177 = vpack.c.b16 %v151, %v149
    %v178 = vpack.c.b16 %v152, %v150
    %v179 = vpack.c.b16 %v155, %v153
    %v180 = vpack.c.b16 %v156, %v154
    %v181 = vpack.c.b16 %v159, %v157
    %v182 = vpack.c.b16 %v160, %v158
    %v183 = vpack.c.b16 %v163, %v161
    %v184 = vpack.c.b16 %v164, %v162
    %v185 = vpack.c.b16 %v167, %v165
    %v186 = vpack.c.b16 %v168, %v166
    %v187 = vpack.c.b16 %v171, %v169
    %v188 = vpack.c.b16 %v172, %v170
    %205 = vmatprep.subr.bf16.mxu0 %v174
    %206 = vmatpush1.bf16.msra.mxu0 %v173
    %207 = vmatprep.subr.bf16.mxu0 %v176
    %208 = vmatpush1.bf16.msra.mxu0 %v175
    %209 = vmatprep.subr.bf16.mxu0 %v178
    %210 = vmatpush1.bf16.msra.mxu0 %v177
    %211 = vmatprep.subr.bf16.mxu0 %v180
    %212 = vmatpush1.bf16.msra.mxu0 %v179
    %213 = vmatprep.subr.bf16.mxu0 %v182
    %214 = vmatpush1.bf16.msra.mxu0 %v181
    %215 = vmatprep.subr.bf16.mxu0 %v184
    %216 = vmatpush1.bf16.msra.mxu0 %v183
    %217 = vmatprep.subr.bf16.mxu0 %v186
    %218 = vmatpush1.bf16.msra.mxu0 %v185
    %219 = vmatprep.subr.bf16.mxu0 %v188
    %220 = vmatpush1.bf16.msra.mxu0 %v187
    %221 = vmatprep.subr.bf16.mxu0 0
    %222 = vmatpush1.bf16.msra.mxu0 0
    %223 = vmatprep.subr.bf16.mxu0 0
    %224 = vmatpush1.bf16.msra.mxu0 0
    %225 = vmatprep.subr.bf16.mxu0 0
    %226 = vmatpush1.bf16.msra.mxu0 0
    %227 = vmatprep.subr.bf16.mxu0 0
    %228 = vmatpush1.bf16.msra.mxu0 0
    %229 = vmatprep.subr.bf16.mxu0 0
    %230 = vmatpush1.bf16.msra.mxu0 0
    %231 = vmatprep.subr.bf16.mxu0 0
    %232 = vmatpush1.bf16.msra.mxu0 0
    %233 = vmatprep.subr.bf16.mxu0 0
    %234 = vmatpush1.bf16.msra.mxu0 0
    %235 = vmatprep.subr.bf16.mxu0 0
    %236 = vmatpush1.bf16.msra.mxu0 0
    %237 = vmatprep.mubr.bf16.mxu0 0
    %238 = vmatmul.mubr.bf16.gmra.mrb[0].mxu0 %v123
    %v239 = vpop.f32.mrb[0].mxu0
    %v240 = vadd.f32 0.0, %v239
    %v241 = vpop.f32.mrb[0].mxu0
    %v242 = vadd.f32 0.0, %v241
    %v243 = vpop.f32.mrb[0].mxu0
    %v244 = vadd.f32 0.0, %v243
    %v245 = vpop.f32.mrb[0].mxu0
    %v246 = vadd.f32 0.0, %v245
    %247 = vdwg.mxu0
    %v248 = vadd.f32 %v113, %v240
    %v249 = vadd.f32 %v114, %v242
    %v250 = vadd.f32 %v115, %v244
    %v251 = vadd.f32 %v116, %v246
    %252 = vst [vmem:[#allocation8] sm:$0xff] %v248
    %253 = vst [vmem:[#allocation8 + $0x8] sm:$0xff] %v249
    %254 = vst [vmem:[#allocation8 + $0x10] sm:$0xff] %v250
    %255 = vst [vmem:[#allocation8 + $0x18] sm:$0xff] %v251
    // Predicated region
    $region30: #{tpu_custom_call.1} parent=1 // pred_check
      _
    $region31: #{tpu_custom_call.1} parent=1 // pred_check_branch
      %257 = sbr.rel (0) target = $region33
    $region32: #{tpu_custom_call.1} parent=1 // pred_region
      %s259 = ssub.s32 512, 512
      %260 = vsyncadd [#allocation4], %s259
      %s261 = sshll.u32 [#allocation8], 4
      %s262 = int_to_ptr.vmem [resolvable:$true] %s261
      %267 = dma.vmem_to_hbm [thread:$0]  %s262, 512, %s3, [#allocation4], 256, 256, 16
    $region33: #{tpu_custom_call.1} parent=1 // pred_fallthru
      _
    // Predicated region
    $region34: #{tpu_custom_call.1} parent=1 // pred_check
      _
    $region35: #{tpu_custom_call.1} parent=1 // pred_check_branch
      %269 = sbr.rel (0) target = $region37
    $region36: #{tpu_custom_call.1} parent=1 // pred_region
      %270 = dma.done [#allocation4], 512
    $region37: #{tpu_custom_call.1} parent=1 // pred_fallthru
      _
    %271 = vsyncpa [#allocation3], 1
    %272 = vsyncpa [#allocation6], 1
    %273 = vsyncpa [#allocation4], 1

</llo_original>
